<compile_context>
chip_gen: v6e
topology: v6e:2x2x1
jax: 0.10.0
libtpu: 0.0.40
codegen_flags: <defaults>
</compile_context>

<pallas_src>
import functools

import jax
import jax.numpy as jnp
import numpy as np
from jax.experimental import pallas as pl
from jax.experimental.pallas import tpu as pltpu


def _round_up(x: int, m: int) -> int:
    return ((x + m - 1) // m) * m


def swiglu_kernel(x_ref, w12_ref, w3_ref, o_ref, acc_ref, *, th):
    # Grid: (M tiles ["parallel"], hidden tiles ["arbitrary" reduction])
    # x_ref:   (tm, dim_p)       token tile
    # w12_ref: (dim_p, 2*th)     [W1_block_k | W2_block_k]
    # w3_ref:  (th, dim_p)       W3 rows for hidden block k
    # o_ref:   (tm, dim_p)
    # acc_ref: (tm, dim_p) f32   accumulator, resident across the hidden axis
    k = pl.program_id(1)

    @pl.when(k == 0)
    def _():
        acc_ref[...] = jnp.zeros_like(acc_ref)

    # One fused matmul for both gate projections; f32 accumulation on the MXU.
    h = jnp.dot(x_ref[...], w12_ref[...], preferred_element_type=jnp.float32)
    h1 = h[:, :th]          # lane-aligned split (th is a multiple of 128)
    h2 = h[:, th:]
    gated = h1 * jax.nn.sigmoid(h1) * h2              # SwiGLU gate, kept in f32

    acc_ref[...] += jnp.dot(gated.astype(w3_ref.dtype), w3_ref[...],
                            preferred_element_type=jnp.float32)

    @pl.when(k == pl.num_programs(1) - 1)
    def _():
        o_ref[...] = acc_ref[...].astype(o_ref.dtype)


def swiglu_ffn(x, w1, w2, w3, *, tm=256, th=512):
    """x: (B, S, dim). w1,w2: (dim, hidden). w3: (hidden, dim)."""
    B, S, dim = x.shape
    hidden = w1.shape[1]
    dtype = x.dtype
    M = B * S

    # ---- Padded, hardware-aligned sizes -------------------------------------
    dim_p = _round_up(dim, 128)                       # lane-dense output stores
    tm = max(8, min(tm, _round_up(M, 8)))             # token tile (sublane mult.)
    M_p = _round_up(M, tm)
    th = max(128, min(_round_up(th, 128), _round_up(hidden, 128)))
    hidden_p = _round_up(hidden, th)
    n_h = hidden_p // th

    # ---- Zero-pad inputs (padding contributes exact zeros) ------------------
    x2d = jnp.pad(x.reshape(M, dim), ((0, M_p - M), (0, dim_p - dim)))
    w1p = jnp.pad(w1, ((0, dim_p - dim), (0, hidden_p - hidden)))
    w2p = jnp.pad(w2, ((0, dim_p - dim), (0, hidden_p - hidden)))
    w3p = jnp.pad(w3, ((0, hidden_p - hidden), (0, dim_p - dim)))

    # Interleave W1/W2 per hidden tile so a single rectangular (dim_p, 2*th)
    # block k holds [W1_block_k | W2_block_k] -> one fused matmul per grid step.
    w12 = jnp.concatenate(
        [w1p.reshape(dim_p, n_h, th), w2p.reshape(dim_p, n_h, th)], axis=2
    ).reshape(dim_p, n_h * 2 * th)

    # ---- Compiler budgets ----------------------------------------------------
    itemsize = jnp.dtype(dtype).itemsize
    buf_bytes = (
        2 * (tm * dim_p + dim_p * 2 * th + th * dim_p + tm * dim_p) * itemsize  # dbl-buffered I/O
        + tm * dim_p * 4                                                         # f32 accumulator
    )
    vmem_limit = int(min(max(buf_bytes * 5 // 4 + (4 << 20), 32 << 20), 128 << 20))

    flops = 6 * M_p * dim_p * hidden_p + 3 * M_p * hidden_p
    bytes_accessed = (x2d.size + w12.size + w3p.size + M_p * dim_p) * itemsize
    cost = pl.CostEstimate(flops=int(flops),
                           transcendentals=int(M_p * hidden_p),
                           bytes_accessed=int(bytes_accessed))

    kernel = functools.partial(swiglu_kernel, th=th)

    out_p = pl.pallas_call(
        kernel,
        out_shape=jax.ShapeDtypeStruct((M_p, dim_p), dtype),
        grid_spec=pltpu.PrefetchScalarGridSpec(
            num_scalar_prefetch=0,
            grid=(M_p // tm, n_h),
            in_specs=[
                pl.BlockSpec((tm, dim_p), lambda i, k: (i, 0)),       # x tile
                pl.BlockSpec((dim_p, 2 * th), lambda i, k: (0, k)),   # [W1|W2] block
                pl.BlockSpec((th, dim_p), lambda i, k: (k, 0)),       # W3 block
            ],
            out_specs=pl.BlockSpec((tm, dim_p), lambda i, k: (i, 0)),
            scratch_shapes=[pltpu.VMEM((tm, dim_p), jnp.float32)],
        ),
        compiler_params=pltpu.CompilerParams(
            dimension_semantics=("parallel", "arbitrary"),
            vmem_limit_bytes=vmem_limit,
        ),
        cost_estimate=cost,
    )(x2d, w12, w3p)

    return out_p[:M, :dim].reshape(B, S, dim)


def swiglu_ref(x, w1, w2, w3):
    h1 = jnp.einsum("bsd,dh->bsh", x, w1)
    h2 = jnp.einsum("bsd,dh->bsh", x, w2)
    g = h1 * jax.nn.sigmoid(h1) * h2
    return jnp.einsum("bsh,hd->bsd", g, w3)


if __name__ == "__main__":
    # Small shapes consistent with the module: dim=32, hidden=64, batch=2, seq=8.
    B, S, dim, hidden = 2, 8, 32, 64

    key = jax.random.PRNGKey(0)
    kx, k1, k2, k3 = jax.random.split(key, 4)

    x = jax.random.normal(kx, (B, S, dim), dtype=jnp.float32)
    # nn.Linear(dim, hidden, bias=False).weight has shape (hidden, dim);
    # we store the transposed (dim, hidden) form for x @ W.
    w1 = jax.random.normal(k1, (dim, hidden), dtype=jnp.float32) * (1.0 / np.sqrt(dim))
    w2 = jax.random.normal(k2, (dim, hidden), dtype=jnp.float32) * (1.0 / np.sqrt(dim))
    w3 = jax.random.normal(k3, (hidden, dim), dtype=jnp.float32) * (1.0 / np.sqrt(hidden))

    # TODO(synk): dropout with p>0.0 would need pltpu.prng_* inside the kernel;
    # the module defaults to p=0.0 (identity), which is what is implemented.

    out = swiglu_ffn(x, w1, w2, w3)
    out = jax.block_until_ready(out)

    ref = swiglu_ref(x, w1, w2, w3)
    np.testing.assert_allclose(np.asarray(out), np.asarray(ref), rtol=1e-4, atol=1e-4)

    print("KERNEL_OK")
</pallas_src>

<mosaic_0001>
module attributes {stable_mosaic.version = 11 : i64} {
  func.func @swiglu_kernel(%arg0: i32, %arg1: i32, %arg2: memref<16x128xf32, #tpu.memory_space<vmem>>, %arg3: memref<128x256xf32, #tpu.memory_space<vmem>>, %arg4: memref<128x128xf32, #tpu.memory_space<vmem>>, %arg5: memref<16x128xf32, #tpu.memory_space<vmem>>, %arg6: memref<16x128xf32, #tpu.memory_space<vmem>>) attributes {dimension_semantics = [#tpu.dimension_semantics<parallel>, #tpu.dimension_semantics<arbitrary>], iteration_bounds = array<i64: 1, 1>, scalar_prefetch = 0 : i64, scratch_operands = 1 : i64, tpu.core_type = #tpu.core_type<tc>, window_params = [{transform_indices = @transform_0, window_bounds = array<i64: 16, 128>}, {transform_indices = @transform_1, window_bounds = array<i64: 128, 256>}, {transform_indices = @transform_2, window_bounds = array<i64: 128, 128>}, {transform_indices = @transform_3, window_bounds = array<i64: 16, 128>}]} {
    %c0_i32 = arith.constant 0 : i32
    %0 = arith.cmpi eq, %arg1, %c0_i32 : i32
    %1 = arith.extui %0 : i1 to i32
    %c0_i32_0 = arith.constant 0 : i32
    %2 = arith.cmpi ne, %1, %c0_i32_0 : i32
    scf.if %2 {
      %cst_14 = arith.constant 0.000000e+00 : f32
      %23 = vector.broadcast %cst_14 : f32 to vector<16x128xf32>
      %c0_15 = arith.constant 0 : index
      %c0_16 = arith.constant 0 : index
      %24 = vector.load %arg6[%c0_15, %c0_16] : memref<16x128xf32, #tpu.memory_space<vmem>>, vector<16x128xf32>
      tpu.vector_store %arg6[%c0_15, %c0_16], %23 {strides = array<i32>} : memref<16x128xf32, #tpu.memory_space<vmem>>, vector<16x128xf32>,
    } else {
    }
    %c0 = arith.constant 0 : index
    %c0_1 = arith.constant 0 : index
    %3 = vector.load %arg2[%c0, %c0_1] : memref<16x128xf32, #tpu.memory_space<vmem>>, vector<16x128xf32>
    %c0_2 = arith.constant 0 : index
    %c0_3 = arith.constant 0 : index
    %4 = vector.load %arg3[%c0_2, %c0_3] : memref<128x256xf32, #tpu.memory_space<vmem>>, vector<128x256xf32>
    %cst = arith.constant dense<0.000000e+00> : vector<16x256xf32>
    %5 = tpu.matmul %3, %4, %cst {dimension_numbers = #tpu.dot_dimension_numbers<[1], [0], [0], [1], [0, 0, 1, 1], [], []>} : vector<16x128xf32>, vector<128x256xf32>, vector<16x256xf32> -> vector<16x256xf32>
    %6 = vector.extract_strided_slice %5 {offsets = [0, 0], sizes = [16, 128], strides = [1, 1]} : vector<16x256xf32> to vector<16x128xf32>
    %7 = vector.extract_strided_slice %5 {offsets = [0, 128], sizes = [16, 128], strides = [1, 1]} : vector<16x256xf32> to vector<16x128xf32>
    %8 = arith.negf %6 : vector<16x128xf32>
    %9 = math.exp %8 : vector<16x128xf32>
    %cst_4 = arith.constant 1.000000e+00 : f32
    %10 = vector.broadcast %cst_4 : f32 to vector<16x128xf32>
    %11 = arith.addf %10, %9 : vector<16x128xf32>
    %12 = arith.divf %10, %11 : vector<16x128xf32>
    %13 = arith.mulf %6, %12 : vector<16x128xf32>
    %14 = arith.mulf %13, %7 : vector<16x128xf32>
    %c0_5 = arith.constant 0 : index
    %c0_6 = arith.constant 0 : index
    %15 = vector.load %arg6[%c0_5, %c0_6] : memref<16x128xf32, #tpu.memory_space<vmem>>, vector<16x128xf32>
    %c0_7 = arith.constant 0 : index
    %c0_8 = arith.constant 0 : index
    %16 = vector.load %arg4[%c0_7, %c0_8] : memref<128x128xf32, #tpu.memory_space<vmem>>, vector<128x128xf32>
    %cst_9 = arith.constant dense<0.000000e+00> : vector<16x128xf32>
    %17 = tpu.matmul %14, %16, %cst_9 {dimension_numbers = #tpu.dot_dimension_numbers<[1], [0], [0], [1], [0, 0, 1, 1], [], []>} : vector<16x128xf32>, vector<128x128xf32>, vector<16x128xf32> -> vector<16x128xf32>
    %18 = arith.addf %15, %17 : vector<16x128xf32>
    %c0_10 = arith.constant 0 : index
    %c0_11 = arith.constant 0 : index
    %19 = vector.load %arg6[%c0_10, %c0_11] : memref<16x128xf32, #tpu.memory_space<vmem>>, vector<16x128xf32>
    tpu.vector_store %arg6[%c0_10, %c0_11], %18 {strides = array<i32>} : memref<16x128xf32, #tpu.memory_space<vmem>>, vector<16x128xf32>,
    %c0_i32_12 = arith.constant 0 : i32
    %20 = arith.cmpi eq, %arg1, %c0_i32_12 : i32
    %21 = arith.extui %20 : i1 to i32
    %c0_i32_13 = arith.constant 0 : i32
    %22 = arith.cmpi ne, %21, %c0_i32_13 : i32
    scf.if %22 {
      %c0_14 = arith.constant 0 : index
      %c0_15 = arith.constant 0 : index
      %23 = vector.load %arg6[%c0_14, %c0_15] : memref<16x128xf32, #tpu.memory_space<vmem>>, vector<16x128xf32>
      %c0_16 = arith.constant 0 : index
      %c0_17 = arith.constant 0 : index
      %24 = vector.load %arg5[%c0_16, %c0_17] : memref<16x128xf32, #tpu.memory_space<vmem>>, vector<16x128xf32>
      tpu.vector_store %arg5[%c0_16, %c0_17], %23 {strides = array<i32>} : memref<16x128xf32, #tpu.memory_space<vmem>>, vector<16x128xf32>,
    } else {
    }
    return
  }
  func.func @transform_0(%arg0: i32, %arg1: i32) -> (i32, i32) {
    %c0_i32 = arith.constant 0 : i32
    %c0_i32_0 = arith.constant 0 : i32
    return %arg0, %c0_i32 : i32, i32
  }
  func.func @transform_1(%arg0: i32, %arg1: i32) -> (i32, i32) {
    %c0_i32 = arith.constant 0 : i32
    %c0_i32_0 = arith.constant 0 : i32
    return %c0_i32, %arg1 : i32, i32
  }
  func.func @transform_2(%arg0: i32, %arg1: i32) -> (i32, i32) {
    %c0_i32 = arith.constant 0 : i32
    %c0_i32_0 = arith.constant 0 : i32
    return %arg1, %c0_i32 : i32, i32
  }
  func.func @transform_3(%arg0: i32, %arg1: i32) -> (i32, i32) {
    %c0_i32 = arith.constant 0 : i32
    %c0_i32_0 = arith.constant 0 : i32
    return %arg0, %c0_i32 : i32, i32
  }
}

</mosaic_0001>

<llo_original>
// kernel: tpu_custom_call.1
$region0: #{tpu_custom_call.1}
  #allocation0 [shape = 'u32[]', space=smem, size = 0x4, offset = 0x4, fixed_abs, tag = 'smem constant byte address 0x4 - core index']
  #allocation1 [shape = 'u32[144,128]{1,0:T(1,128)}', space=vmem, size = 0x12000, scoped, tag = 'internal scratch']
  #allocation2 [shape = 'f32[16,128]{1,0:T(8,128)}', space=vmem, size = 0x2000, scoped, tag = 'scratch operand']
  %s0 = inlined_call_operand.hbm [shape: f32[16,128], index: 0, kind: input, shape index: {}]
  %s1 = inlined_call_operand.hbm [shape: f32[128,256], index: 1, kind: input, shape index: {}]
  %s2 = inlined_call_operand.hbm [shape: f32[128,128], index: 2, kind: input, shape index: {}]
  %s3 = inlined_call_operand.hbm [shape: f32[16,128], index: 3, kind: output, shape index: {}]
  %s4 = sld [smem:[#allocation0]]
  $region42: #{tpu_custom_call.1} parent=0
    _
  %s6 = ssub.s32 1, %s4
  %s7 = scalar_select 0, %s6, %s4
  $region1: #{tpu_custom_call.1} parent=0
    #allocation3 [shape = 'u8[8192]{0}', space=vmem, size = 0x2000, scoped, tag = 'input window, operand 0, single buffered']
    #allocation4 [shape = 's32[1]{0}', space=sflag, size = 0x4, scoped, tag = 'scoped memory for tpu_custom_call.1']
    #allocation5 [shape = 's32[1]{0}', space=sflag, size = 0x4, scoped, tag = 'scoped memory for tpu_custom_call.1']
    #allocation6 [shape = 'u8[131072]{0}', space=vmem, size = 0x20000, scoped, tag = 'input window, operand 1, single buffered']
    #allocation7 [shape = 's32[1]{0}', space=sflag, size = 0x4, scoped, tag = 'scoped memory for tpu_custom_call.1']
    #allocation8 [shape = 'u8[65536]{0}', space=vmem, size = 0x10000, scoped, tag = 'input window, operand 2, single buffered']
    #allocation9 [shape = 'u8[8192]{0}', space=vmem, size = 0x2000, scoped, tag = 'output window, operand 0, single buffered']
    %8 = vsyncpa [#allocation4], 0
    %9 = vsyncpa [#allocation7], 0
    %10 = vsyncpa [#allocation5], 0
    // Predicated region
    $region2: #{tpu_custom_call.1} parent=1 // pred_check
      _
    $region3: #{tpu_custom_call.1} parent=1 // pred_check_branch
      %12 = sbr.rel (0) target = $region5
    $region4: #{tpu_custom_call.1} parent=1 // pred_region
      %s14 = ssub.s32 256, 256
      %15 = vsyncadd [#allocation4], %s14
      %s16 = sshll.u32 [#allocation3], 4
      %s17 = int_to_ptr.vmem [resolvable:$true] %s16
      %22 = dma.hbm_to_vmem [thread:$0]  %s0, 256, %s17, [#allocation4], 128, 128, 8
    $region5: #{tpu_custom_call.1} parent=1 // pred_fallthru
      _
    // Predicated region
    $region6: #{tpu_custom_call.1} parent=1 // pred_check
      _
    $region7: #{tpu_custom_call.1} parent=1 // pred_check_branch
      %24 = sbr.rel (0) target = $region9
    $region8: #{tpu_custom_call.1} parent=1 // pred_region
      %s26 = ssub.s32 4096, 4096
      %27 = vsyncadd [#allocation7], %s26
      %s28 = sshll.u32 [#allocation6], 4
      %s29 = int_to_ptr.vmem [resolvable:$true] %s28
      %34 = dma.hbm_to_vmem [thread:$0]  %s1, 4096, %s29, [#allocation7], 256, 256, 16
    $region9: #{tpu_custom_call.1} parent=1 // pred_fallthru
      _
    // Predicated region
    $region10: #{tpu_custom_call.1} parent=1 // pred_check
      _
    $region11: #{tpu_custom_call.1} parent=1 // pred_check_branch
      %36 = sbr.rel (0) target = $region13
    $region12: #{tpu_custom_call.1} parent=1 // pred_region
      %s38 = ssub.s32 2048, 2048
      %39 = vsyncadd [#allocation7], %s38
      %s40 = sshll.u32 [#allocation8], 4
      %s41 = int_to_ptr.vmem [resolvable:$true] %s40
      %46 = dma.hbm_to_vmem [thread:$0]  %s2, 2048, %s41, [#allocation7], 128, 128, 8
    $region13: #{tpu_custom_call.1} parent=1 // pred_fallthru
      _
    // Predicated region
    $region14: #{tpu_custom_call.1} parent=1 // pred_check
      _
    $region15: #{tpu_custom_call.1} parent=1 // pred_check_branch
      %48 = sbr.rel (0) target = $region17
    $region16: #{tpu_custom_call.1} parent=1 // pred_region
      %49 = dma.done [#allocation4], 256
    $region17: #{tpu_custom_call.1} parent=1 // pred_fallthru
      _
    // Predicated region
    $region18: #{tpu_custom_call.1} parent=1 // pred_check
      _
    $region19: #{tpu_custom_call.1} parent=1 // pred_check_branch
      %51 = sbr.rel (0) target = $region21
    $region20: #{tpu_custom_call.1} parent=1 // pred_region
      %52 = dma.done [#allocation7], 4096
    $region21: #{tpu_custom_call.1} parent=1 // pred_fallthru
      _
    // Predicated region
    $region22: #{tpu_custom_call.1} parent=1 // pred_check
      _
    $region23: #{tpu_custom_call.1} parent=1 // pred_check_branch
      %54 = sbr.rel (0) target = $region25
    $region24: #{tpu_custom_call.1} parent=1 // pred_region
      %55 = dma.done [#allocation7], 2048
    $region25: #{tpu_custom_call.1} parent=1 // pred_fallthru
      _
    %p56 = scmp.eq.s32.totalorder 0, 0
    // Predicated region
    $region26: #{tpu_custom_call.1} parent=1 // pred_check
      %p57 = pneg %p56
    $region27: #{tpu_custom_call.1} parent=1 // pred_check_branch
      %59 = sbr.rel (%p57) target = $region29
    $region28: #{tpu_custom_call.1} parent=1 // pred_region
      %60 = vst [vmem:[#allocation2] sm:$0xff] 0.0
      %61 = vst [vmem:[#allocation2 + $0x8] sm:$0xff] 0.0
    $region29: #{tpu_custom_call.1} parent=1 // pred_fallthru
      _
    %v62 = vld [vmem:[#allocation3] sm:$0xff]
    %v63 = vld [vmem:[#allocation3 + $0x8] sm:$0xff]
    %v64 = vld [vmem:[#allocation6] sm:$0xff]
    %v65 = vld [vmem:[#allocation6 + $0x8] sm:$0xff]
    %v66 = vld [vmem:[#allocation6 + $0x10] sm:$0xff]
    %v67 = vld [vmem:[#allocation6 + $0x18] sm:$0xff]
    %v68 = vld [vmem:[#allocation6 + $0x20] sm:$0xff]
    %v69 = vld [vmem:[#allocation6 + $0x28] sm:$0xff]
    %v70 = vld [vmem:[#allocation6 + $0x30] sm:$0xff]
    %v71 = vld [vmem:[#allocation6 + $0x38] sm:$0xff]
    %v72 = vld [vmem:[#allocation6 + $0x40] sm:$0xff]
    %v73 = vld [vmem:[#allocation6 + $0x48] sm:$0xff]
    %v74 = vld [vmem:[#allocation6 + $0x50] sm:$0xff]
    %v75 = vld [vmem:[#allocation6 + $0x58] sm:$0xff]
    %v76 = vld [vmem:[#allocation6 + $0x60] sm:$0xff]
    %v77 = vld [vmem:[#allocation6 + $0x68] sm:$0xff]
    %v78 = vld [vmem:[#allocation6 + $0x70] sm:$0xff]
    %v79 = vld [vmem:[#allocation6 + $0x78] sm:$0xff]
    %v80 = vld [vmem:[#allocation6 + $0x80] sm:$0xff]
    %v81 = vld [vmem:[#allocation6 + $0x88] sm:$0xff]
    %v82 = vld [vmem:[#allocation6 + $0x90] sm:$0xff]
    %v83 = vld [vmem:[#allocation6 + $0x98] sm:$0xff]
    %v84 = vld [vmem:[#allocation6 + $0xa0] sm:$0xff]
    %v85 = vld [vmem:[#allocation6 + $0xa8] sm:$0xff]
    %v86 = vld [vmem:[#allocation6 + $0xb0] sm:$0xff]
    %v87 = vld [vmem:[#allocation6 + $0xb8] sm:$0xff]
    %v88 = vld [vmem:[#allocation6 + $0xc0] sm:$0xff]
    %v89 = vld [vmem:[#allocation6 + $0xc8] sm:$0xff]
    %v90 = vld [vmem:[#allocation6 + $0xd0] sm:$0xff]
    %v91 = vld [vmem:[#allocation6 + $0xd8] sm:$0xff]
    %v92 = vld [vmem:[#allocation6 + $0xe0] sm:$0xff]
    %v93 = vld [vmem:[#allocation6 + $0xe8] sm:$0xff]
    %v94 = vld [vmem:[#allocation6 + $0xf0] sm:$0xff]
    %v95 = vld [vmem:[#allocation6 + $0xf8] sm:$0xff]
    %96 = vmatprep.subr.mxu0 %v95
    %97 = vmatpush1.msra.mxu0 %v94
    %98 = vmatprep.subr.mxu0 %v93
    %99 = vmatpush1.msra.mxu0 %v92
    %100 = vmatprep.subr.mxu0 %v91
    %101 = vmatpush1.msra.mxu0 %v90
    %102 = vmatprep.subr.mxu0 %v89
    %103 = vmatpush1.msra.mxu0 %v88
    %104 = vmatprep.subr.mxu0 %v87
    %105 = vmatpush1.msra.mxu0 %v86
    %106 = vmatprep.subr.mxu0 %v85
    %107 = vmatpush1.msra.mxu0 %v84
    %108 = vmatprep.subr.mxu0 %v83
    %109 = vmatpush1.msra.mxu0 %v82
    %110 = vmatprep.subr.mxu0 %v81
    %111 = vmatpush1.msra.mxu0 %v80
    %112 = vmatprep.subr.mxu0 %v79
    %113 = vmatpush1.msra.mxu0 %v78
    %114 = vmatprep.subr.mxu0 %v77
    %115 = vmatpush1.msra.mxu0 %v76
    %116 = vmatprep.subr.mxu0 %v75
    %117 = vmatpush1.msra.mxu0 %v74
    %118 = vmatprep.subr.mxu0 %v73
    %119 = vmatpush1.msra.mxu0 %v72
    %120 = vmatprep.subr.mxu0 %v71
    %121 = vmatpush1.msra.mxu0 %v70
    %122 = vmatprep.subr.mxu0 %v69
    %123 = vmatpush1.msra.mxu0 %v68
    %124 = vmatprep.subr.mxu0 %v67
    %125 = vmatpush1.msra.mxu0 %v66
    %126 = vmatprep.subr.mxu0 %v65
    %127 = vmatpush1.msra.mxu0 %v64
    %128 = vmatprep.subr.mxu0 0.0
    %129 = vmatpush2.msra.mxu0 0.0
    %130 = vmatprep.subr.mxu0 0.0
    %131 = vmatpush2.msra.mxu0 0.0
    %132 = vmatprep.subr.mxu0 0.0
    %133 = vmatpush2.msra.mxu0 0.0
    %134 = vmatprep.subr.mxu0 0.0
    %135 = vmatpush2.msra.mxu0 0.0
    %136 = vmatprep.subr.mxu0 0.0
    %137 = vmatpush2.msra.mxu0 0.0
    %138 = vmatprep.subr.mxu0 0.0
    %139 = vmatpush2.msra.mxu0 0.0
    %140 = vmatprep.subr.mxu0 0.0
    %141 = vmatpush2.msra.mxu0 0.0
    %142 = vmatprep.subr.mxu0 0.0
    %143 = vmatpush2.msra.mxu0 0.0
    %144 = vmatprep.subr.mxu0 0.0
    %145 = vmatpush2.msra.mxu0 0.0
    %146 = vmatprep.subr.mxu0 0.0
    %147 = vmatpush2.msra.mxu0 0.0
    %148 = vmatprep.subr.mxu0 0.0
    %149 = vmatpush2.msra.mxu0 0.0
    %150 = vmatprep.subr.mxu0 0.0
    %151 = vmatpush2.msra.mxu0 0.0
    %152 = vmatprep.subr.mxu0 0.0
    %153 = vmatpush2.msra.mxu0 0.0
    %154 = vmatprep.subr.mxu0 0.0
    %155 = vmatpush2.msra.mxu0 0.0
    %156 = vmatprep.subr.mxu0 0.0
    %157 = vmatpush2.msra.mxu0 0.0
    %158 = vmatprep.subr.mxu0 0.0
    %159 = vmatpush2.msra.mxu0 0.0
    %160 = vmatprep.mubr.f32.mxu0 0.0
    %161 = vmatmul.mubr.f32.gmra.mxu0 %v62
    %v162 = vpop.f32.mrf.mxu0
    %v163 = vadd.f32 0.0, %v162
    %v164 = vpop.f32.mrf.mxu0
    %v165 = vadd.f32 0.0, %v164
    %166 = vmatprep.mubr.f32.mxu0 0.0
    %167 = vmatmul.mubr.f32.gmra.mxu0 %v63
    %v168 = vpop.f32.mrf.mxu0
    %v169 = vadd.f32 0.0, %v168
    %v170 = vpop.f32.mrf.mxu0
    %v171 = vadd.f32 0.0, %v170
    %172 = vdwg.mxu0
    %v173 = vxor.u32 %v163, 2147483648
    %v174 = vxor.u32 %v169, 2147483648
    %v175 = vmul.f32 %v173, 1.442695
    %v176 = vpow.pop %v175
    %v177 = vmul.f32 %v174, 1.442695
    %v178 = vpow.pop %v177
    %v179 = vadd.f32 %v176, 1.0
    %v180 = vadd.f32 %v178, 1.0
    %v181 = vrcp.pop %v179
    %v182 = vmul.f32 1.0, %v181
    %v183 = vrcp.pop %v180
    %v184 = vmul.f32 1.0, %v183
    %v185 = vmul.f32 %v163, %v182
    %v186 = vmul.f32 %v169, %v184
    %v187 = vmul.f32 %v185, %v165
    %v188 = vmul.f32 %v186, %v171
    %v189 = vld [vmem:[#allocation2] sm:$0xff]
    %v190 = vld [vmem:[#allocation2 + $0x8] sm:$0xff]
    %v191 = vld [vmem:[#allocation8] sm:$0xff]
    %v192 = vld [vmem:[#allocation8 + $0x8] sm:$0xff]
    %v193 = vld [vmem:[#allocation8 + $0x10] sm:$0xff]
    %v194 = vld [vmem:[#allocation8 + $0x18] sm:$0xff]
    %v195 = vld [vmem:[#allocation8 + $0x20] sm:$0xff]
    %v196 = vld [vmem:[#allocation8 + $0x28] sm:$0xff]
    %v197 = vld [vmem:[#allocation8 + $0x30] sm:$0xff]
    %v198 = vld [vmem:[#allocation8 + $0x38] sm:$0xff]
    %v199 = vld [vmem:[#allocation8 + $0x40] sm:$0xff]
    %v200 = vld [vmem:[#allocation8 + $0x48] sm:$0xff]
    %v201 = vld [vmem:[#allocation8 + $0x50] sm:$0xff]
    %v202 = vld [vmem:[#allocation8 + $0x58] sm:$0xff]
    %v203 = vld [vmem:[#allocation8 + $0x60] sm:$0xff]
    %v204 = vld [vmem:[#allocation8 + $0x68] sm:$0xff]
    %v205 = vld [vmem:[#allocation8 + $0x70] sm:$0xff]
    %v206 = vld [vmem:[#allocation8 + $0x78] sm:$0xff]
    %207 = vmatprep.subr.mxu0 0.0
    %208 = vmatpush1.msra.mxu0 %v206
    %209 = vmatprep.subr.mxu0 0.0
    %210 = vmatpush1.msra.mxu0 %v205
    %211 = vmatprep.subr.mxu0 0.0
    %212 = vmatpush1.msra.mxu0 %v204
    %213 = vmatprep.subr.mxu0 0.0
    %214 = vmatpush1.msra.mxu0 %v203
    %215 = vmatprep.subr.mxu0 0.0
    %216 = vmatpush1.msra.mxu0 %v202
    %217 = vmatprep.subr.mxu0 0.0
    %218 = vmatpush1.msra.mxu0 %v201
    %219 = vmatprep.subr.mxu0 0.0
    %220 = vmatpush1.msra.mxu0 %v200
    %221 = vmatprep.subr.mxu0 0.0
    %222 = vmatpush1.msra.mxu0 %v199
    %223 = vmatprep.subr.mxu0 0.0
    %224 = vmatpush1.msra.mxu0 %v198
    %225 = vmatprep.subr.mxu0 0.0
    %226 = vmatpush1.msra.mxu0 %v197
    %227 = vmatprep.subr.mxu0 0.0
    %228 = vmatpush1.msra.mxu0 %v196
    %229 = vmatprep.subr.mxu0 0.0
    %230 = vmatpush1.msra.mxu0 %v195
    %231 = vmatprep.subr.mxu0 0.0
    %232 = vmatpush1.msra.mxu0 %v194
    %233 = vmatprep.subr.mxu0 0.0
    %234 = vmatpush1.msra.mxu0 %v193
    %235 = vmatprep.subr.mxu0 0.0
    %236 = vmatpush1.msra.mxu0 %v192
    %237 = vmatprep.subr.mxu0 0.0
    %238 = vmatpush1.msra.mxu0 %v191
    %239 = vmatprep.subr.mxu0 0.0
    %240 = vmatpush2.msra.mxu0 0.0
    %241 = vmatprep.subr.mxu0 0.0
    %242 = vmatpush2.msra.mxu0 0.0
    %243 = vmatprep.subr.mxu0 0.0
    %244 = vmatpush2.msra.mxu0 0.0
    %245 = vmatprep.subr.mxu0 0.0
    %246 = vmatpush2.msra.mxu0 0.0
    %247 = vmatprep.subr.mxu0 0.0
    %248 = vmatpush2.msra.mxu0 0.0
    %249 = vmatprep.subr.mxu0 0.0
    %250 = vmatpush2.msra.mxu0 0.0
    %251 = vmatprep.subr.mxu0 0.0
    %252 = vmatpush2.msra.mxu0 0.0
    %253 = vmatprep.subr.mxu0 0.0
    %254 = vmatpush2.msra.mxu0 0.0
    %255 = vmatprep.subr.mxu0 0.0
    %256 = vmatpush2.msra.mxu0 0.0
    %257 = vmatprep.subr.mxu0 0.0
    %258 = vmatpush2.msra.mxu0 0.0
    %259 = vmatprep.subr.mxu0 0.0
    %260 = vmatpush2.msra.mxu0 0.0
    %261 = vmatprep.subr.mxu0 0.0
    %262 = vmatpush2.msra.mxu0 0.0
    %263 = vmatprep.subr.mxu0 0.0
    %264 = vmatpush2.msra.mxu0 0.0
    %265 = vmatprep.subr.mxu0 0.0
    %266 = vmatpush2.msra.mxu0 0.0
    %267 = vmatprep.subr.mxu0 0.0
    %268 = vmatpush2.msra.mxu0 0.0
    %269 = vmatprep.subr.mxu0 0.0
    %270 = vmatpush2.msra.mxu0 0.0
    %271 = vmatprep.mubr.f32.mxu0 0.0
    %272 = vmatmul.mubr.f32.gmra.mxu0 %v187
    %v273 = vpop.f32.mrf.mxu0
    %v274 = vadd.f32 0.0, %v273
    %v275 = vpop.f32.mrf.mxu0
    %276 = vmatprep.mubr.f32.mxu0 0.0
    %277 = vmatmul.mubr.f32.gmra.mxu0 %v188
    %v278 = vpop.f32.mrf.mxu0
    %v279 = vadd.f32 0.0, %v278
    %v280 = vpop.f32.mrf.mxu0
    %281 = vdwg.mxu0
    %v282 = vadd.f32 %v189, %v274
    %v283 = vadd.f32 %v190, %v279
    %284 = vst [vmem:[#allocation2] sm:$0xff] %v282
    %285 = vst [vmem:[#allocation2 + $0x8] sm:$0xff] %v283
    // Predicated region
    $region30: #{tpu_custom_call.1} parent=1 // pred_check
      %p286 = pneg %p56
    $region31: #{tpu_custom_call.1} parent=1 // pred_check_branch
      %288 = sbr.rel (%p286) target = $region33
    $region32: #{tpu_custom_call.1} parent=1 // pred_region
      %v289 = vld [vmem:[#allocation2] sm:$0xff]
      %v290 = vld [vmem:[#allocation2 + $0x8] sm:$0xff]
      %291 = vst [vmem:[#allocation9] sm:$0xff] %v289
      %292 = vst [vmem:[#allocation9 + $0x8] sm:$0xff] %v290
    $region33: #{tpu_custom_call.1} parent=1 // pred_fallthru
      _
    // Predicated region
    $region34: #{tpu_custom_call.1} parent=1 // pred_check
      _
    $region35: #{tpu_custom_call.1} parent=1 // pred_check_branch
      %294 = sbr.rel (0) target = $region37
    $region36: #{tpu_custom_call.1} parent=1 // pred_region
      %s296 = ssub.s32 256, 256
      %297 = vsyncadd [#allocation5], %s296
      %s298 = sshll.u32 [#allocation9], 4
      %s299 = int_to_ptr.vmem [resolvable:$true] %s298
      %304 = dma.vmem_to_hbm [thread:$0]  %s299, 256, %s3, [#allocation5], 128, 128, 8
    $region37: #{tpu_custom_call.1} parent=1 // pred_fallthru
      _
    // Predicated region
    $region38: #{tpu_custom_call.1} parent=1 // pred_check
      _
    $region39: #{tpu_custom_call.1} parent=1 // pred_check_branch
      %306 = sbr.rel (0) target = $region41
    $region40: #{tpu_custom_call.1} parent=1 // pred_region
      %307 = dma.done [#allocation5], 256
    $region41: #{tpu_custom_call.1} parent=1 // pred_fallthru
      _
    %308 = vsyncpa [#allocation4], 1
    %309 = vsyncpa [#allocation7], 1
    %310 = vsyncpa [#allocation5], 1

</llo_original>
